<compile_context>
chip_gen: v5e
topology: v5e:2x2
jax: 0.10.0
libtpu: 0.0.40
codegen_flags: <defaults>
</compile_context>

<pallas_src>
from functools import partial

import jax
import jax.numpy as jnp
from jax.experimental import pallas as pl
from jax.experimental.pallas import tpu as pltpu

NEG_SLOPE = 0.01   # nn.LeakyReLU default
LN_EPS = 1e-5      # nn.LayerNorm default

H1, H2, H3 = 32, 16, 8   # hidden sizes from the PyTorch module


def _round_up(a, b):
    return (a + b - 1) // b * b


def _leaky_relu(x):
    return jnp.where(x > 0, x, NEG_SLOPE * x)


def _layer_norm(x, gamma, beta):
    # two-pass (centered) variance: matches PyTorch LayerNorm, no cancellation issues
    mu = jnp.mean(x, axis=-1, keepdims=True)
    xc = x - mu
    var = jnp.mean(xc * xc, axis=-1, keepdims=True)
    return xc * jax.lax.rsqrt(var + LN_EPS) * gamma + beta


def qnetwork_kernel(x_ref, wp_ref, vp_ref, o_ref, *, r1, act_pad):
    """x_ref: (tile_b, r1) zero-padded input; wp_ref: packed weights (r1+H1+H2+H3, width);
    vp_ref: packed biases/gamma/beta (8, width); o_ref: (tile_b, act_pad) thin output block."""
    x = x_ref[...]

    # ---- layer 1: Linear(state_dim, 32) on MXU (input padded to r1 cols, pad rows are zero) ----
    h = jnp.dot(x, wp_ref[0:r1, 0:H1],
                preferred_element_type=jnp.float32) + vp_ref[0:1, 0:H1]
    h = _leaky_relu(h)

    # ---- layer 2: Linear(32, 16) on MXU + LayerNorm(16) + LeakyReLU ----
    r2 = r1
    h = jnp.dot(h, wp_ref[r2:r2 + H1, 0:H2],
                preferred_element_type=jnp.float32) + vp_ref[1:2, 0:H2]
    h = _leaky_relu(_layer_norm(h, vp_ref[2:3, 0:H2], vp_ref[3:4, 0:H2]))

    # ---- layer 3: Linear(16, 8) on MXU + LayerNorm(8) + LeakyReLU ----
    r3 = r2 + H1
    h = jnp.dot(h, wp_ref[r3:r3 + H2, 0:H3],
                preferred_element_type=jnp.float32) + vp_ref[4:5, 0:H3]
    h = _leaky_relu(_layer_norm(h, vp_ref[5:6, 0:H3], vp_ref[6:7, 0:H3]))

    # ---- layer 4: Linear(8, action_dim) on MXU, thin (act_pad-wide) output ----
    r4 = r3 + H2
    out = jnp.dot(h, wp_ref[r4:r4 + H3, 0:act_pad],
                  preferred_element_type=jnp.float32) + vp_ref[7:8, 0:act_pad]
    o_ref[...] = out.astype(o_ref.dtype)


def pack_params(params, state_dim, action_dim):
    """Coalesce all weights/biases into two lane-padded arrays. Call once (outside forward)."""
    r1 = _round_up(state_dim, 8)                 # sublane-aligned row offset for w2 in wpack
    act_pad = _round_up(action_dim, 8)           # thin output width (block == full last dim)
    width = max(128, act_pad)

    wpack = jnp.zeros((r1 + H1 + H2 + H3, width), jnp.float32)
    wpack = wpack.at[0:state_dim, 0:H1].set(params["w1"])
    wpack = wpack.at[r1:r1 + H1, 0:H2].set(params["w2"])
    wpack = wpack.at[r1 + H1:r1 + H1 + H2, 0:H3].set(params["w3"])
    wpack = wpack.at[r1 + H1 + H2:r1 + H1 + H2 + H3, 0:action_dim].set(params["w4"])

    vpack = jnp.zeros((8, width), jnp.float32)
    vpack = vpack.at[0, 0:H1].set(params["b1"].reshape(-1))
    vpack = vpack.at[1, 0:H2].set(params["b2"].reshape(-1))
    vpack = vpack.at[2, 0:H2].set(params["g2"].reshape(-1))
    vpack = vpack.at[3, 0:H2].set(params["be2"].reshape(-1))
    vpack = vpack.at[4, 0:H3].set(params["b3"].reshape(-1))
    vpack = vpack.at[5, 0:H3].set(params["g3"].reshape(-1))
    vpack = vpack.at[6, 0:H3].set(params["be3"].reshape(-1))
    vpack = vpack.at[7, 0:action_dim].set(params["b4"].reshape(-1))
    return wpack, vpack, r1, act_pad


def qnetwork_forward(x, wpack, vpack, *, state_dim, action_dim, r1, act_pad, tile_b=None):
    """x: (B, state_dim) float32. Returns (B, action_dim)."""
    B = x.shape[0]

    # Batch tiling: big tiles (few grid steps), but keep grid >= 2 when batch allows it
    # so the "parallel" axis is sharded across both TensorCores on v7x.
    B_pad = _round_up(max(B, 8), 8)
    if tile_b is None:
        tile_b = min(B_pad, 2048)
    tile_b = _round_up(min(tile_b, B_pad), 8)
    if B_pad > 8 and B_pad <= tile_b:
        tile_b = _round_up(-(-B_pad // 2), 8)
    B_pad = _round_up(B_pad, tile_b)
    grid = B_pad // tile_b

    # Pad input to (B_pad, r1): pad columns are zero so the layer-1 MXU dot is exact.
    x_pad = jnp.zeros((B_pad, r1), jnp.float32).at[:B, :state_dim].set(x)

    kernel = partial(qnetwork_kernel, r1=r1, act_pad=act_pad)

    out = pl.pallas_call(
        kernel,
        out_shape=jax.ShapeDtypeStruct((B_pad, act_pad), jnp.float32),
        grid_spec=pltpu.PrefetchScalarGridSpec(
            num_scalar_prefetch=0,
            grid=(grid,),
            in_specs=[
                pl.BlockSpec((tile_b, r1), lambda i: (i, 0)),
                pl.BlockSpec(wpack.shape, lambda i: (0, 0)),   # resident across grid steps
                pl.BlockSpec(vpack.shape, lambda i: (0, 0)),   # resident across grid steps
            ],
            out_specs=pl.BlockSpec((tile_b, act_pad), lambda i: (i, 0)),
        ),
        compiler_params=pltpu.CompilerParams(
            dimension_semantics=("parallel",)),
    )(x_pad, wpack, vpack)

    return out[:B, :action_dim]


def init_params(key, state_dim, action_dim):
    """Mirrors PyTorch nn.Linear default init U(-1/sqrt(fan_in), 1/sqrt(fan_in));
    LayerNorm gamma=1, beta=0. Weights stored (in, out) so the kernel does x @ W + b."""
    def linear(key, fan_in, fan_out):
        kw, kb = jax.random.split(key)
        bound = 1.0 / jnp.sqrt(fan_in)
        w = jax.random.uniform(kw, (fan_in, fan_out), jnp.float32, -bound, bound)
        b = jax.random.uniform(kb, (1, fan_out), jnp.float32, -bound, bound)
        return w, b

    k1, k2, k3, k4 = jax.random.split(key, 4)
    w1, b1 = linear(k1, state_dim, H1)
    w2, b2 = linear(k2, H1, H2)
    w3, b3 = linear(k3, H2, H3)
    w4, b4 = linear(k4, H3, action_dim)
    return dict(
        w1=w1, b1=b1,
        w2=w2, b2=b2, g2=jnp.ones((1, H2), jnp.float32), be2=jnp.zeros((1, H2), jnp.float32),
        w3=w3, b3=b3, g3=jnp.ones((1, H3), jnp.float32), be3=jnp.zeros((1, H3), jnp.float32),
        w4=w4, b4=b4,
    )


def qnetwork_ref(x, p):
    """Pure-JAX reference with the same semantics as the PyTorch module."""
    h = _leaky_relu(x @ p["w1"] + p["b1"])
    h = _leaky_relu(_layer_norm(h @ p["w2"] + p["b2"], p["g2"], p["be2"]))
    h = _leaky_relu(_layer_norm(h @ p["w3"] + p["b3"], p["g3"], p["be3"]))
    return h @ p["w4"] + p["b4"]


if __name__ == "__main__":
    state_dim, action_dim, batch = 4, 2, 16
    key = jax.random.PRNGKey(0)
    kx, kp = jax.random.split(key)

    x = jax.random.normal(kx, (batch, state_dim), jnp.float32)
    params = init_params(kp, state_dim, action_dim)

    # Packing hoisted out of the forward path: done once per parameter update.
    wpack, vpack, r1, act_pad = pack_params(params, state_dim, action_dim)

    out = qnetwork_forward(x, wpack, vpack,
                           state_dim=state_dim, action_dim=action_dim,
                           r1=r1, act_pad=act_pad)
    out = jax.block_until_ready(out)

    ref = qnetwork_ref(x, params)
    assert out.shape == (batch, action_dim)
    assert jnp.allclose(out, ref, atol=1e-5, rtol=1e-5), "mismatch vs reference"
    print("KERNEL_OK")
</pallas_src>

<mosaic_0001>
module attributes {stable_mosaic.version = 11 : i64} {
  func.func @qnetwork_kernel(%arg0: i32, %arg1: memref<8x8xf32, #tpu.memory_space<vmem>>, %arg2: memref<64x128xf32, #tpu.memory_space<vmem>>, %arg3: memref<8x128xf32, #tpu.memory_space<vmem>>, %arg4: memref<8x8xf32, #tpu.memory_space<vmem>>) attributes {dimension_semantics = [#tpu.dimension_semantics<parallel>], iteration_bounds = array<i64: 2>, scalar_prefetch = 0 : i64, scratch_operands = 0 : i64, tpu.core_type = #tpu.core_type<tc>, window_params = [{transform_indices = @transform_0, window_bounds = array<i64: 8, 8>}, {pipeline_mode = #tpu.pipeline_mode<synchronous>, transform_indices = @transform_1, window_bounds = array<i64: 64, 128>}, {pipeline_mode = #tpu.pipeline_mode<synchronous>, transform_indices = @transform_2, window_bounds = array<i64: 8, 128>}, {transform_indices = @transform_3, window_bounds = array<i64: 8, 8>}]} {
    %c0 = arith.constant 0 : index
    %c0_0 = arith.constant 0 : index
    %0 = vector.load %arg1[%c0, %c0_0] : memref<8x8xf32, #tpu.memory_space<vmem>>, vector<8x8xf32>
    %c0_1 = arith.constant 0 : index
    %c0_2 = arith.constant 0 : index
    %1 = vector.load %arg2[%c0_1, %c0_2] : memref<64x128xf32, #tpu.memory_space<vmem>>, vector<8x32xf32>
    %cst = arith.constant dense<0.000000e+00> : vector<8x32xf32>
    %2 = tpu.matmul %0, %1, %cst {dimension_numbers = #tpu.dot_dimension_numbers<[1], [0], [0], [1], [0, 0, 1, 1], [], []>} : vector<8x8xf32>, vector<8x32xf32>, vector<8x32xf32> -> vector<8x32xf32>
    %c0_3 = arith.constant 0 : index
    %c0_4 = arith.constant 0 : index
    %3 = vector.load %arg3[%c0_3, %c0_4] : memref<8x128xf32, #tpu.memory_space<vmem>>, vector<1x32xf32>
    %4 = vector.broadcast %3 : vector<1x32xf32> to vector<8x32xf32>
    %5 = arith.addf %2, %4 : vector<8x32xf32>
    %cst_5 = arith.constant 0.000000e+00 : f32
    %6 = vector.broadcast %cst_5 : f32 to vector<8x32xf32>
    %7 = arith.cmpf ogt, %5, %6 : vector<8x32xf32>
    %cst_6 = arith.constant 0.00999999977 : f32
    %8 = vector.broadcast %cst_6 : f32 to vector<8x32xf32>
    %9 = arith.mulf %8, %5 : vector<8x32xf32>
    %10 = arith.select %7, %5, %9 : vector<8x32xi1>, vector<8x32xf32>
    %c8 = arith.constant 8 : index
    %c0_7 = arith.constant 0 : index
    %11 = vector.load %arg2[%c8, %c0_7] : memref<64x128xf32, #tpu.memory_space<vmem>>, vector<32x16xf32>
    %cst_8 = arith.constant dense<0.000000e+00> : vector<8x16xf32>
    %12 = tpu.matmul %10, %11, %cst_8 {dimension_numbers = #tpu.dot_dimension_numbers<[1], [0], [0], [1], [0, 0, 1, 1], [], []>} : vector<8x32xf32>, vector<32x16xf32>, vector<8x16xf32> -> vector<8x16xf32>
    %c1 = arith.constant 1 : index
    %c0_9 = arith.constant 0 : index
    %13 = vector.load %arg3[%c1, %c0_9] : memref<8x128xf32, #tpu.memory_space<vmem>>, vector<1x16xf32>
    %14 = vector.broadcast %13 : vector<1x16xf32> to vector<8x16xf32>
    %15 = arith.addf %12, %14 : vector<8x16xf32>
    %c2 = arith.constant 2 : index
    %c0_10 = arith.constant 0 : index
    %16 = vector.load %arg3[%c2, %c0_10] : memref<8x128xf32, #tpu.memory_space<vmem>>, vector<1x16xf32>
    %c3 = arith.constant 3 : index
    %c0_11 = arith.constant 0 : index
    %17 = vector.load %arg3[%c3, %c0_11] : memref<8x128xf32, #tpu.memory_space<vmem>>, vector<1x16xf32>
    %cst_12 = arith.constant dense<0.000000e+00> : vector<8xf32>
    %18 = vector.multi_reduction <add>, %15, %cst_12 [1] : vector<8x16xf32> to vector<8xf32>
    %19 = vector.shape_cast %18 : vector<8xf32> to vector<8x1xf32>
    %cst_13 = arith.constant 1.600000e+01 : f32
    %20 = vector.broadcast %cst_13 : f32 to vector<8x1xf32>
    %21 = arith.divf %19, %20 : vector<8x1xf32>
    %22 = vector.broadcast %21 : vector<8x1xf32> to vector<8x16xf32>
    %23 = arith.subf %15, %22 : vector<8x16xf32>
    %24 = arith.mulf %23, %23 : vector<8x16xf32>
    %cst_14 = arith.constant dense<0.000000e+00> : vector<8xf32>
    %25 = vector.multi_reduction <add>, %24, %cst_14 [1] : vector<8x16xf32> to vector<8xf32>
    %26 = vector.shape_cast %25 : vector<8xf32> to vector<8x1xf32>
    %cst_15 = arith.constant 1.600000e+01 : f32
    %27 = vector.broadcast %cst_15 : f32 to vector<8x1xf32>
    %28 = arith.divf %26, %27 : vector<8x1xf32>
    %cst_16 = arith.constant 9.99999974E-6 : f32
    %29 = vector.broadcast %cst_16 : f32 to vector<8x1xf32>
    %30 = arith.addf %28, %29 : vector<8x1xf32>
    %31 = math.rsqrt %30 : vector<8x1xf32>
    %32 = vector.broadcast %31 : vector<8x1xf32> to vector<8x16xf32>
    %33 = arith.mulf %23, %32 : vector<8x16xf32>
    %34 = vector.broadcast %16 : vector<1x16xf32> to vector<8x16xf32>
    %35 = arith.mulf %33, %34 : vector<8x16xf32>
    %36 = vector.broadcast %17 : vector<1x16xf32> to vector<8x16xf32>
    %37 = arith.addf %35, %36 : vector<8x16xf32>
    %cst_17 = arith.constant 0.000000e+00 : f32
    %38 = vector.broadcast %cst_17 : f32 to vector<8x16xf32>
    %39 = arith.cmpf ogt, %37, %38 : vector<8x16xf32>
    %cst_18 = arith.constant 0.00999999977 : f32
    %40 = vector.broadcast %cst_18 : f32 to vector<8x16xf32>
    %41 = arith.mulf %40, %37 : vector<8x16xf32>
    %42 = arith.select %39, %37, %41 : vector<8x16xi1>, vector<8x16xf32>
    %c40 = arith.constant 40 : index
    %c0_19 = arith.constant 0 : index
    %43 = vector.load %arg2[%c40, %c0_19] : memref<64x128xf32, #tpu.memory_space<vmem>>, vector<16x8xf32>
    %cst_20 = arith.constant dense<0.000000e+00> : vector<8x8xf32>
    %44 = tpu.matmul %42, %43, %cst_20 {dimension_numbers = #tpu.dot_dimension_numbers<[1], [0], [0], [1], [0, 0, 1, 1], [], []>} : vector<8x16xf32>, vector<16x8xf32>, vector<8x8xf32> -> vector<8x8xf32>
    %c4 = arith.constant 4 : index
    %c0_21 = arith.constant 0 : index
    %45 = vector.load %arg3[%c4, %c0_21] : memref<8x128xf32, #tpu.memory_space<vmem>>, vector<1x8xf32>
    %46 = vector.broadcast %45 : vector<1x8xf32> to vector<8x8xf32>
    %47 = arith.addf %44, %46 : vector<8x8xf32>
    %c5 = arith.constant 5 : index
    %c0_22 = arith.constant 0 : index
    %48 = vector.load %arg3[%c5, %c0_22] : memref<8x128xf32, #tpu.memory_space<vmem>>, vector<1x8xf32>
    %c6 = arith.constant 6 : index
    %c0_23 = arith.constant 0 : index
    %49 = vector.load %arg3[%c6, %c0_23] : memref<8x128xf32, #tpu.memory_space<vmem>>, vector<1x8xf32>
    %cst_24 = arith.constant dense<0.000000e+00> : vector<8xf32>
    %50 = vector.multi_reduction <add>, %47, %cst_24 [1] : vector<8x8xf32> to vector<8xf32>
    %51 = vector.shape_cast %50 : vector<8xf32> to vector<8x1xf32>
    %cst_25 = arith.constant 8.000000e+00 : f32
    %52 = vector.broadcast %cst_25 : f32 to vector<8x1xf32>
    %53 = arith.divf %51, %52 : vector<8x1xf32>
    %54 = vector.broadcast %53 : vector<8x1xf32> to vector<8x8xf32>
    %55 = arith.subf %47, %54 : vector<8x8xf32>
    %56 = arith.mulf %55, %55 : vector<8x8xf32>
    %cst_26 = arith.constant dense<0.000000e+00> : vector<8xf32>
    %57 = vector.multi_reduction <add>, %56, %cst_26 [1] : vector<8x8xf32> to vector<8xf32>
    %58 = vector.shape_cast %57 : vector<8xf32> to vector<8x1xf32>
    %cst_27 = arith.constant 8.000000e+00 : f32
    %59 = vector.broadcast %cst_27 : f32 to vector<8x1xf32>
    %60 = arith.divf %58, %59 : vector<8x1xf32>
    %cst_28 = arith.constant 9.99999974E-6 : f32
    %61 = vector.broadcast %cst_28 : f32 to vector<8x1xf32>
    %62 = arith.addf %60, %61 : vector<8x1xf32>
    %63 = math.rsqrt %62 : vector<8x1xf32>
    %64 = vector.broadcast %63 : vector<8x1xf32> to vector<8x8xf32>
    %65 = arith.mulf %55, %64 : vector<8x8xf32>
    %66 = vector.broadcast %48 : vector<1x8xf32> to vector<8x8xf32>
    %67 = arith.mulf %65, %66 : vector<8x8xf32>
    %68 = vector.broadcast %49 : vector<1x8xf32> to vector<8x8xf32>
    %69 = arith.addf %67, %68 : vector<8x8xf32>
    %cst_29 = arith.constant 0.000000e+00 : f32
    %70 = vector.broadcast %cst_29 : f32 to vector<8x8xf32>
    %71 = arith.cmpf ogt, %69, %70 : vector<8x8xf32>
    %cst_30 = arith.constant 0.00999999977 : f32
    %72 = vector.broadcast %cst_30 : f32 to vector<8x8xf32>
    %73 = arith.mulf %72, %69 : vector<8x8xf32>
    %74 = arith.select %71, %69, %73 : vector<8x8xi1>, vector<8x8xf32>
    %c56 = arith.constant 56 : index
    %c0_31 = arith.constant 0 : index
    %75 = vector.load %arg2[%c56, %c0_31] : memref<64x128xf32, #tpu.memory_space<vmem>>, vector<8x8xf32>
    %cst_32 = arith.constant dense<0.000000e+00> : vector<8x8xf32>
    %76 = tpu.matmul %74, %75, %cst_32 {dimension_numbers = #tpu.dot_dimension_numbers<[1], [0], [0], [1], [0, 0, 1, 1], [], []>} : vector<8x8xf32>, vector<8x8xf32>, vector<8x8xf32> -> vector<8x8xf32>
    %c7 = arith.constant 7 : index
    %c0_33 = arith.constant 0 : index
    %77 = vector.load %arg3[%c7, %c0_33] : memref<8x128xf32, #tpu.memory_space<vmem>>, vector<1x8xf32>
    %78 = vector.broadcast %77 : vector<1x8xf32> to vector<8x8xf32>
    %79 = arith.addf %76, %78 : vector<8x8xf32>
    %c0_34 = arith.constant 0 : index
    %c0_35 = arith.constant 0 : index
    %80 = vector.load %arg4[%c0_34, %c0_35] : memref<8x8xf32, #tpu.memory_space<vmem>>, vector<8x8xf32>
    tpu.vector_store %arg4[%c0_34, %c0_35], %79 {strides = array<i32>} : memref<8x8xf32, #tpu.memory_space<vmem>>, vector<8x8xf32>,
    return
  }
  func.func @transform_0(%arg0: i32) -> (i32, i32) {
    %c0_i32 = arith.constant 0 : i32
    %c0_i32_0 = arith.constant 0 : i32
    return %arg0, %c0_i32 : i32, i32
  }
  func.func @transform_1(%arg0: i32) -> (i32, i32) {
    %c0_i32 = arith.constant 0 : i32
    %c0_i32_0 = arith.constant 0 : i32
    %c0_i32_1 = arith.constant 0 : i32
    return %c0_i32, %c0_i32_0 : i32, i32
  }
  func.func @transform_2(%arg0: i32) -> (i32, i32) {
    %c0_i32 = arith.constant 0 : i32
    %c0_i32_0 = arith.constant 0 : i32
    %c0_i32_1 = arith.constant 0 : i32
    return %c0_i32, %c0_i32_0 : i32, i32
  }
  func.func @transform_3(%arg0: i32) -> (i32, i32) {
    %c0_i32 = arith.constant 0 : i32
    %c0_i32_0 = arith.constant 0 : i32
    return %arg0, %c0_i32 : i32, i32
  }
}

</mosaic_0001>

<llo_original>
// kernel: tpu_custom_call.1
$region0: #{tpu_custom_call.1}
  #allocation0 [shape = 'u32[]', space=smem, size = 0x4, offset = 0x4, fixed_abs, tag = 'smem constant byte address 0x4 - core index']
  #allocation1 [shape = 'u32[72,128]{1,0:T(1,128)}', space=vmem, size = 0x9000, scoped, tag = 'internal scratch']
  %s0 = inlined_call_operand.vmem [shape: f32[16,8], index: 0, kind: input, shape index: {}]
  %s1 = inlined_call_operand.hbm [shape: f32[64,128], index: 1, kind: input, shape index: {}]
  %s2 = inlined_call_operand.vmem [shape: f32[8,128], index: 2, kind: input, shape index: {}]
  %s3 = inlined_call_operand.vmem [shape: f32[16,8], index: 3, kind: output, shape index: {}]
  %s4 = sld [smem:[#allocation0]]
  $region49: #{tpu_custom_call.1} parent=0
    _
  %s6 = ssub.s32 1, %s4
  %s7 = scalar_select 0, %s6, %s4
  $region1: #{tpu_custom_call.1} parent=0
    #allocation2 [shape = 'u8[32768]{0}', space=vmem, size = 0x8000, scoped, tag = 'input window, operand 1, single buffered']
    #allocation3 [shape = 's32[2]{0}', space=sflag, size = 0x8, scoped, tag = 'scoped memory for tpu_custom_call.1']
    %8 = vsyncpa [#allocation3], 0
    loop: start=0, step=1, limit=4
    $region2: #{tpu_custom_call.1} parent=1 // loop_pre_header
      _
    $region3: #{tpu_custom_call.1} parent=1 // loop_header
      %s10 = sphi 0, %s14
      %p11 = scmp.ge.s32.totalorder %s10, 4
      %s20 = sphi 0, %s22
      %s23 = sphi 0, %s20
      %s24 = sphi 0, %s23
      %s40 = sphi 0, %s24
      %s44 = sphi 0, %s44
      %s46 = sphi 0, %s44
      %s47 = sphi 0, %s46
      %s61 = sphi 0, %s47
      %s65 = sphi 0, %s65
      %s67 = sphi 0, %s65
      %s68 = sphi 0, %s67
      %s82 = sphi 0, %s68
      %s88 = sphi 0, %s90
      %s91 = sphi 0, %s88
      %s92 = sphi 0, %s91
      %s108 = sphi 0, %s92
    $region4: #{tpu_custom_call.1} parent=1 // loop_header_branch
      %13 = sbr.rel (%p11) target = $region8
    $region5: #{tpu_custom_call.1} parent=1 // loop_body
      %s15 = ssub.s32 %s10, 1
      %s16 = ssub.s32 %s10, 2
      %s17 = sadd.s32 %s10, 1
      %s18 = ssub.s32 %s10, %s17
      %p19 = scmp.eq.s32.totalorder %s18, 0
      %s21 = sadd.s32 %s20, 1
      %s22 = scalar_select %p19, %s20, %s21
      %p25 = pneg %p19
      %p26 = scmp.eq.s32.totalorder %s10, 1
      %p27 = por %p25, %p26
      %p28 = scmp.ne.s32.totalorder %s20, %s23
      %p29 = scmp.eq.s32.totalorder %s10, 0
      %p30 = por %p28, %p29
      %p31 = scmp.ne.s32.totalorder %s20, %s23
      %p32 = scmp.eq.s32.totalorder %s15, 1
      %p33 = por %p31, %p32
      %p34 = scmp.ne.s32.totalorder %s23, %s24
      %p35 = scmp.eq.s32.totalorder %s15, 0
      %p36 = por %p34, %p35
      %p37 = scmp.ne.s32.totalorder %s23, %s24
      %p38 = scmp.eq.s32.totalorder %s16, 1
      %p39 = por %p37, %p38
      %p41 = scmp.ne.s32.totalorder %s24, %s40
      %p42 = scmp.eq.s32.totalorder %s16, 0
      %p43 = por %p41, %p42
      %s45 = sadd.s32 %s44, 1
      %p48 = scmp.eq.s32.totalorder %s10, 1
      %p49 = scmp.ne.s32.totalorder %s44, %s46
      %p50 = scmp.eq.s32.totalorder %s10, 0
      %p51 = por %p49, %p50
      %p52 = scmp.ne.s32.totalorder %s44, %s46
      %p53 = scmp.eq.s32.totalorder %s15, 1
      %p54 = por %p52, %p53
      %p55 = scmp.ne.s32.totalorder %s46, %s47
      %p56 = scmp.eq.s32.totalorder %s15, 0
      %p57 = por %p55, %p56
      %p58 = scmp.ne.s32.totalorder %s46, %s47
      %p59 = scmp.eq.s32.totalorder %s16, 1
      %p60 = por %p58, %p59
      %p62 = scmp.ne.s32.totalorder %s47, %s61
      %p63 = scmp.eq.s32.totalorder %s16, 0
      %p64 = por %p62, %p63
      %s66 = sadd.s32 %s65, 1
      %p69 = scmp.eq.s32.totalorder %s10, 1
      %p70 = scmp.ne.s32.totalorder %s65, %s67
      %p71 = scmp.eq.s32.totalorder %s10, 0
      %p72 = por %p70, %p71
      %p73 = scmp.ne.s32.totalorder %s65, %s67
      %p74 = scmp.eq.s32.totalorder %s15, 1
      %p75 = por %p73, %p74
      %p76 = scmp.ne.s32.totalorder %s67, %s68
      %p77 = scmp.eq.s32.totalorder %s15, 0
      %p78 = por %p76, %p77
      %p79 = scmp.ne.s32.totalorder %s67, %s68
      %p80 = scmp.eq.s32.totalorder %s16, 1
      %p81 = por %p79, %p80
      %p83 = scmp.ne.s32.totalorder %s68, %s82
      %p84 = scmp.eq.s32.totalorder %s16, 0
      %p85 = por %p83, %p84
      %s86 = ssub.s32 %s10, %s17
      %p87 = scmp.eq.s32.totalorder %s86, 0
      %s89 = sadd.s32 %s88, 1
      %s90 = scalar_select %p87, %s88, %s89
      %p93 = pneg %p87
      %p94 = scmp.eq.s32.totalorder %s10, 1
      %p95 = por %p93, %p94
      %p96 = scmp.ne.s32.totalorder %s88, %s91
      %p97 = scmp.eq.s32.totalorder %s10, 0
      %p98 = por %p96, %p97
      %p99 = scmp.ne.s32.totalorder %s88, %s91
      %p100 = scmp.eq.s32.totalorder %s15, 1
      %p101 = por %p99, %p100
      %p102 = scmp.ne.s32.totalorder %s91, %s92
      %p103 = scmp.eq.s32.totalorder %s15, 0
      %p104 = por %p102, %p103
      %p105 = scmp.ne.s32.totalorder %s91, %s92
      %p106 = scmp.eq.s32.totalorder %s16, 1
      %p107 = por %p105, %p106
      %p109 = scmp.ne.s32.totalorder %s92, %s108
      %p110 = scmp.eq.s32.totalorder %s16, 0
      %p111 = por %p109, %p110
      %p112 = scmp.le.s32.totalorder 1, %s10
      %p113 = scmp.lt.s32.totalorder %s10, 3
      %p114 = pnand %p112, %p113
      %p115 = pneg %p114
      // Predicated region
      $region9: #{tpu_custom_call.1} parent=5 // pred_check
        _
      $region10: #{tpu_custom_call.1} parent=5 // pred_check_branch
        %117 = sbr.rel (%p114) target = $region12
      $region11: #{tpu_custom_call.1} parent=5 // pred_region
        %s118 = ssub.s32 %s10, 1
        // Predicated region
        $region13: #{tpu_custom_call.1} parent=11 // pred_check
          %p119 = pneg %p57
        $region14: #{tpu_custom_call.1} parent=11 // pred_check_branch
          %121 = sbr.rel (%p119) target = $region16
        $region15: #{tpu_custom_call.1} parent=11 // pred_region
          %123 = vsyncadd [#allocation3], 0
          %s124 = sshll.u32 %s1, 4
          %s125 = int_to_ptr.hbm [resolvable:$true] %s124
          %s126 = sshll.u32 [#allocation2], 4
          %s127 = int_to_ptr.vmem [resolvable:$true] %s126
          %132 = dma.hbm_to_vmem [thread:$0]  %s125, 1024, %s127, [#allocation3], 128, 128, 8
        $region16: #{tpu_custom_call.1} parent=11 // pred_fallthru
          _
        // Predicated region
        $region17: #{tpu_custom_call.1} parent=11 // pred_check
          %p133 = pneg %p78
        $region18: #{tpu_custom_call.1} parent=11 // pred_check_branch
          %135 = sbr.rel (%p133) target = $region20
        $region19: #{tpu_custom_call.1} parent=11 // pred_region
          _
        $region20: #{tpu_custom_call.1} parent=11 // pred_fallthru
          _
      $region12: #{tpu_custom_call.1} parent=5 // pred_fallthru
        _
      %p136 = scmp.lt.s32.totalorder %s10, 2
      // Predicated region
      $region21: #{tpu_custom_call.1} parent=5 // pred_check
        %p137 = pneg %p136
      $region22: #{tpu_custom_call.1} parent=5 // pred_check_branch
        %139 = sbr.rel (%p137) target = $region24
      $region23: #{tpu_custom_call.1} parent=5 // pred_region
        // Predicated region
        $region25: #{tpu_custom_call.1} parent=23 // pred_check
          %p140 = pneg %p30
        $region26: #{tpu_custom_call.1} parent=23 // pred_check_branch
          %142 = sbr.rel (%p140) target = $region28
        $region27: #{tpu_custom_call.1} parent=23 // pred_region
          %p143 = scmp.lt.s32.totalorder %s10, 1
          %s144 = scalar_select %p143, %s10, 1
          %s145 = smul.addr %s144, 8
          %s146 = scalar_lea.vmem %s0, %s145
        $region28: #{tpu_custom_call.1} parent=23 // pred_fallthru
          _
      $region24: #{tpu_custom_call.1} parent=5 // pred_fallthru
        _
      %p147 = scmp.le.s32.totalorder 1, %s10
      %p148 = scmp.lt.s32.totalorder %s10, 3
      %p149 = pnand %p147, %p148
      %p150 = pneg %p149
      // Predicated region
      $region29: #{tpu_custom_call.1} parent=5 // pred_check
        _
      $region30: #{tpu_custom_call.1} parent=5 // pred_check_branch
        %152 = sbr.rel (%p149) target = $region32
      $region31: #{tpu_custom_call.1} parent=5 // pred_region
        %s153 = ssub.s32 %s10, 1
        // Predicated region
        $region33: #{tpu_custom_call.1} parent=31 // pred_check
          %p154 = pneg %p57
        $region34: #{tpu_custom_call.1} parent=31 // pred_check_branch
          %156 = sbr.rel (%p154) target = $region36
        $region35: #{tpu_custom_call.1} parent=31 // pred_region
          %158 = dma.done [#allocation3], 1024
        $region36: #{tpu_custom_call.1} parent=31 // pred_fallthru
          _
        %p159 = scmp.lt.s32.totalorder %s15, 1
        %s160 = scalar_select %p159, %s15, 1
        %s161 = smul.addr %s160, 8
        %s162 = scalar_lea.vmem %s0, %s161
        %p163 = pneg %p36
        %p164 = pneg %p33
        %p165 = pneg %p57
        %p166 = pneg %p54
        %p167 = pneg %p78
        %p168 = pneg %p75
        %p169 = pneg %p104
        %p170 = pneg %p101
        %p171 = scmp.lt.s32.totalorder %s15, 1
        %s172 = scalar_select %p171, %s15, 1
        %s173 = smul.addr %s172, 8
        %s174 = scalar_lea.vmem %s3, %s173
        %p175 = scmp.lt.s32.totalorder %s15, 1
        %s176 = scalar_select %p175, %s15, 1
        %s177 = smul.addr %s176, 8
        %s178 = scalar_lea.vmem %s0, %s177
        %p179 = scmp.lt.s32.totalorder %s15, 1
        %s180 = scalar_select %p179, %s15, 1
        %s181 = smul.addr %s180, 8
        %s182 = scalar_lea.vmem %s3, %s181
        %v183 = vld [vmem:[%s178] sm:$0xff]
        %v184 = vld [vmem:[#allocation2] sm:$0xff]
        %v185 = vld [vmem:[%s2] sm:$0x1]
        %v186 = vperm.slane %v185, 0
        %vm187 = vcmask 64512
        %v189 = vsel %vm187, %v183, 0
        %191 = vmatpush.msra.mxu0 0.0
        %192 = vmatpush.msra.mxu0 0.0
        %193 = vmatpush.msra.mxu0 0.0
        %194 = vmatpush.msra.mxu0 0.0
        %195 = vmatpush.msra.mxu0 0.0
        %196 = vmatpush.msra.mxu0 0.0
        %197 = vmatpush.msra.mxu0 0.0
        %198 = vmatpush.msra.mxu0 0.0
        %199 = vmatpush.msra.mxu0 0.0
        %200 = vmatpush.msra.mxu0 0.0
        %201 = vmatpush.msra.mxu0 0.0
        %202 = vmatpush.msra.mxu0 0.0
        %203 = vmatpush.msra.mxu0 0.0
        %204 = vmatpush.msra.mxu0 0.0
        %205 = vmatpush.msra.mxu0 0.0
        %206 = vmatpush.msra.mxu0 %v184
        %207 = vmatmul.f32.gmra.mxu0 %v189
        %v208 = vpop.f32.mrf.mxu0
        %v209 = vadd.f32 %v186, %v208
        %210 = vdwg.mxu0
        %vm211 = vcmp.gt.f32.partialorder %v209, 0.0
        %v212 = vmul.f32 %v209, 0.01
        %v213 = vsel %vm211, %v209, %v212
        %v214 = vld [vmem:[#allocation2 + $0x8] sm:$0xff]
        %v215 = vld [vmem:[#allocation2 + $0x10] sm:$0xff]
        %v216 = vld [vmem:[#allocation2 + $0x18] sm:$0xff]
        %v217 = vld [vmem:[#allocation2 + $0x20] sm:$0xff]
        %v218 = vld [vmem:[%s2 + $0x1] sm:$0x1]
        %v219 = vperm.slane %v218, 0
        %vm220 = vcmask 261120
        %v222 = vsel %vm220, %v213, 0
        %224 = vmatpush.msra.mxu0 0.0
        %225 = vmatpush.msra.mxu0 0.0
        %226 = vmatpush.msra.mxu0 0.0
        %227 = vmatpush.msra.mxu0 0.0
        %228 = vmatpush.msra.mxu0 0.0
        %229 = vmatpush.msra.mxu0 0.0
        %230 = vmatpush.msra.mxu0 0.0
        %231 = vmatpush.msra.mxu0 0.0
        %232 = vmatpush.msra.mxu0 0.0
        %233 = vmatpush.msra.mxu0 0.0
        %234 = vmatpush.msra.mxu0 0.0
        %235 = vmatpush.msra.mxu0 0.0
        %236 = vmatpush.msra.mxu0 %v217
        %237 = vmatpush.msra.mxu0 %v216
        %238 = vmatpush.msra.mxu0 %v215
        %239 = vmatpush.msra.mxu0 %v214
        %240 = vmatmul.f32.gmra.mxu0 %v222
        %v241 = vpop.f32.mrf.mxu0
        %v242 = vadd.f32 %v219, %v241
        %243 = vdwg.mxu0
        %v244 = vld [vmem:[%s2 + $0x2] sm:$0x1]
        %v245 = vld [vmem:[%s2 + $0x3] sm:$0x1]
        %vm246 = vcmask 130048
        %v247 = vsel %vm246, %v242, 0.0
        %248 = vadd.xlane.f32.xlu0 %v247
        %v249 = vpop.xlane.xlu0 %248
        %v250 = vrcp.pop 16.0
        %v251 = vmul.f32 16.0, %v250
        %v252 = vsub.f32 1.0, %v251
        %v253 = vmul.f32 %v250, %v252
        %v254 = vadd.f32 %v250, %v253
        %vm255 = vweird.f32 %v250
        %v256 = vsel %vm255, %v250, %v254
        %v257 = vmul.f32 %v249, %v256
        %v258 = vsub.f32 %v242, %v257
        %v259 = vmul.f32 %v258, %v258
        %v260 = vsel %vm246, %v259, 0.0
        %261 = vadd.xlane.f32.xlu0 %v260
        %v262 = vpop.xlane.xlu0 %261
        %v263 = vmul.f32 %v262, %v256
        %v264 = vadd.f32 %v263, 1e-05
        %v265 = vrsqrt.pop %v264
        %v266 = vmul.f32 %v265, %v264
        %v267 = vmul.f32 %v266, %v265
        %v268 = vmul.f32 0.5, %v267
        %v269 = vsub.f32 1.5, %v268
        %v270 = vmul.f32 %v265, %v269
        %vm271 = vweird.f32 %v264
        %vm272 = vweird.f32 %v265
        %vm273 = vmor %vm271, %vm272
        %v274 = vsel %vm273, %v265, %v270
        %v275 = vmul.f32 %v258, %v274
        %v276 = vperm.slane %v244, 0
        %v277 = vmul.f32 %v275, %v276
        %v278 = vperm.slane %v245, 0
        %v279 = vadd.f32 %v277, %v278
        %vm280 = vcmp.gt.f32.partialorder %v279, 0.0
        %v281 = vmul.f32 %v279, 0.01
        %v282 = vsel %vm280, %v279, %v281
        %v283 = vld [vmem:[#allocation2 + $0x28] sm:$0xff]
        %v284 = vld [vmem:[#allocation2 + $0x30] sm:$0xff]
        %v285 = vld [vmem:[%s2 + $0x4] sm:$0x1]
        %v286 = vperm.slane %v285, 0
        %v288 = vsel %vm246, %v282, 0
        %290 = vmatpush.msra.mxu0 0.0
        %291 = vmatpush.msra.mxu0 0.0
        %292 = vmatpush.msra.mxu0 0.0
        %293 = vmatpush.msra.mxu0 0.0
        %294 = vmatpush.msra.mxu0 0.0
        %295 = vmatpush.msra.mxu0 0.0
        %296 = vmatpush.msra.mxu0 0.0
        %297 = vmatpush.msra.mxu0 0.0
        %298 = vmatpush.msra.mxu0 0.0
        %299 = vmatpush.msra.mxu0 0.0
        %300 = vmatpush.msra.mxu0 0.0
        %301 = vmatpush.msra.mxu0 0.0
        %302 = vmatpush.msra.mxu0 0.0
        %303 = vmatpush.msra.mxu0 0.0
        %304 = vmatpush.msra.mxu0 %v284
        %305 = vmatpush.msra.mxu0 %v283
        %306 = vmatmul.f32.gmra.mxu0 %v288
        %v307 = vpop.f32.mrf.mxu0
        %v308 = vadd.f32 %v286, %v307
        %309 = vdwg.mxu0
        %v310 = vld [vmem:[%s2 + $0x5] sm:$0x1]
        %v311 = vld [vmem:[%s2 + $0x6] sm:$0x1]
        %v312 = vsel %vm187, %v308, 0.0
        %313 = vadd.xlane.f32.xlu0 %v312
        %v314 = vpop.xlane.xlu0 %313
        %v315 = vrcp.pop 8.0
        %v316 = vmul.f32 8.0, %v315
        %v317 = vsub.f32 1.0, %v316
        %v318 = vmul.f32 %v315, %v317
        %v319 = vadd.f32 %v315, %v318
        %vm320 = vweird.f32 %v315
        %v321 = vsel %vm320, %v315, %v319
        %v322 = vmul.f32 %v314, %v321
        %v323 = vsub.f32 %v308, %v322
        %v324 = vmul.f32 %v323, %v323
        %v325 = vsel %vm187, %v324, 0.0
        %326 = vadd.xlane.f32.xlu0 %v325
        %v327 = vpop.xlane.xlu0 %326
        %v328 = vmul.f32 %v327, %v321
        %v329 = vadd.f32 %v328, 1e-05
        %v330 = vrsqrt.pop %v329
        %v331 = vmul.f32 %v330, %v329
        %v332 = vmul.f32 %v331, %v330
        %v333 = vmul.f32 0.5, %v332
        %v334 = vsub.f32 1.5, %v333
        %v335 = vmul.f32 %v330, %v334
        %vm336 = vweird.f32 %v329
        %vm337 = vweird.f32 %v330
        %vm338 = vmor %vm336, %vm337
        %v339 = vsel %vm338, %v330, %v335
        %v340 = vmul.f32 %v323, %v339
        %v341 = vperm.slane %v310, 0
        %v342 = vmul.f32 %v340, %v341
        %v343 = vperm.slane %v311, 0
        %v344 = vadd.f32 %v342, %v343
        %vm345 = vcmp.gt.f32.partialorder %v344, 0.0
        %v346 = vmul.f32 %v344, 0.01
        %v347 = vsel %vm345, %v344, %v346
        %v348 = vld [vmem:[#allocation2 + $0x38] sm:$0xff]
        %v349 = vld [vmem:[%s2 + $0x7] sm:$0x1]
        %v350 = vperm.slane %v349, 0
        %v352 = vsel %vm187, %v347, 0
        %354 = vmatpush.msra.mxu0 0.0
        %355 = vmatpush.msra.mxu0 0.0
        %356 = vmatpush.msra.mxu0 0.0
        %357 = vmatpush.msra.mxu0 0.0
        %358 = vmatpush.msra.mxu0 0.0
        %359 = vmatpush.msra.mxu0 0.0
        %360 = vmatpush.msra.mxu0 0.0
        %361 = vmatpush.msra.mxu0 0.0
        %362 = vmatpush.msra.mxu0 0.0
        %363 = vmatpush.msra.mxu0 0.0
        %364 = vmatpush.msra.mxu0 0.0
        %365 = vmatpush.msra.mxu0 0.0
        %366 = vmatpush.msra.mxu0 0.0
        %367 = vmatpush.msra.mxu0 0.0
        %368 = vmatpush.msra.mxu0 0.0
        %369 = vmatpush.msra.mxu0 %v348
        %370 = vmatmul.f32.gmra.mxu0 %v352
        %v371 = vpop.f32.mrf.mxu0
        %v372 = vadd.f32 %v350, %v371
        %373 = vdwg.mxu0
        %374 = vst.msk [vmem:[%s182] sm:$0xff] %vm187, %v372
        %p375 = scmp.lt.s32.totalorder %s15, 1
        %s376 = scalar_select %p375, %s15, 1
        %s377 = smul.addr %s376, 8
        %s378 = scalar_lea.vmem %s3, %s377
        // Predicated region
        $region37: #{tpu_custom_call.1} parent=31 // pred_check
          %p379 = pneg %p101
        $region38: #{tpu_custom_call.1} parent=31 // pred_check_branch
          %381 = sbr.rel (%p379) target = $region40
        $region39: #{tpu_custom_call.1} parent=31 // pred_region
          _
        $region40: #{tpu_custom_call.1} parent=31 // pred_fallthru
          _
      $region32: #{tpu_custom_call.1} parent=5 // pred_fallthru
        _
      %p382 = scmp.le.s32.totalorder 2, %s10
      // Predicated region
      $region41: #{tpu_custom_call.1} parent=5 // pred_check
        %p383 = pneg %p382
      $region42: #{tpu_custom_call.1} parent=5 // pred_check_branch
        %385 = sbr.rel (%p383) target = $region44
      $region43: #{tpu_custom_call.1} parent=5 // pred_region
        %s386 = ssub.s32 %s10, 2
        // Predicated region
        $region45: #{tpu_custom_call.1} parent=43 // pred_check
          %p387 = pneg %p107
        $region46: #{tpu_custom_call.1} parent=43 // pred_check_branch
          %389 = sbr.rel (%p387) target = $region48
        $region47: #{tpu_custom_call.1} parent=43 // pred_region
          %p390 = scmp.lt.s32.totalorder %s16, 1
          %s391 = scalar_select %p390, %s16, 1
          %s392 = smul.addr %s391, 8
          %s393 = scalar_lea.vmem %s3, %s392
        $region48: #{tpu_custom_call.1} parent=43 // pred_fallthru
          _
      $region44: #{tpu_custom_call.1} parent=5 // pred_fallthru
        _
    $region6: #{tpu_custom_call.1} parent=1 // loop_footer
      %s14 = sadd.s32 1, %s10
    $region7: #{tpu_custom_call.1} parent=1 // loop_footer_branch
      %9 = sbr.rel target = $region3
    $region8: #{tpu_custom_call.1} parent=1 // loop_exit
      _
    %394 = vsyncpa [#allocation3], 1
    %s395 = scalar_lea.sflag [#allocation3], 1
    %396 = vsyncpa %s395, 1

</llo_original>
